<compile_context>
chip_gen: v7x
topology: tpu7x:2x2x1
jax: 0.10.0
libtpu: 0.0.40
codegen_flags: <defaults>
</compile_context>

<pallas_src>
import math

import jax
import jax.numpy as jnp
from jax.experimental import pallas as pl
from jax.experimental.pallas import tpu as pltpu


def _round_up(n, m):
    return ((n + m - 1) // m) * m


def _sinusoidal_kernel(x_ref, w_ref, p_ref, o_ref):
    # x_ref: (TB, 1)    f32  scalar timesteps for this batch tile
    # w_ref: (1, 2H)    f32  concat([w, w]) * 2*pi   (pre-scaled, one-time)
    # p_ref: (1, 2H)    f32  phase: [0]*H + [pi/2]*H  (sin(t+pi/2) == cos(t))
    # o_ref: (TB, Fpad) f32  layout [sin | cos | x | garbage-pad]
    x = x_ref[...]                                  # (TB, 1)
    w2pi = w_ref[...]                               # (1, 2H)
    phase = p_ref[...]                              # (1, 2H)
    H2 = w2pi.shape[1]                              # 2H (static)

    # One VPU broadcast mul + add, ONE fused sin pass over 2H lanes.
    sc = jnp.sin(x * w2pi + phase)                  # (TB, 2H): [sin | cos]

    # Single lane-0-aligned store for the wide result, one column for x.
    o_ref[:, 0:H2] = sc.astype(o_ref.dtype)
    o_ref[:, H2:H2 + 1] = x.astype(o_ref.dtype)
    # Padded columns / padded rows are intentionally left untouched (garbage);
    # the wrapper slices them away before use.


def learned_sinusoidal_pos_emb(x, weights, *, block_rows=1024):
    """x: (B,) f32, weights: (half_dim,) f32 -> (B, 1 + 2*half_dim) f32."""
    B = x.shape[0]
    H = weights.shape[0]
    out_dim = 1 + 2 * H

    # Lane-dense padded output width (multiple of 128).
    f_pad = _round_up(out_dim, 128)

    # Padding-aware batch tiling.  For large B give the "parallel" grid axis
    # at least 2 steps so v7x's second TensorCore is used; for tiny B keep a
    # single step (launch-overhead dominated anyway).
    min_steps = 2 if B > 256 else 1
    n_steps = max(min_steps, pl.cdiv(B, block_rows))
    tb = _round_up(pl.cdiv(B, n_steps), 8)
    b_pad = _round_up(B, tb)

    # One-time wrapper-side prep: fold 2*pi into the weights, duplicate them
    # for the fused sin/cos pass, and build the pi/2 phase offset.
    x2d = x.astype(jnp.float32).reshape(B, 1)
    if b_pad != B:
        x2d = jnp.pad(x2d, ((0, b_pad - B), (0, 0)))
    w = weights.astype(jnp.float32) * (2.0 * math.pi)
    w_cat = jnp.concatenate([w, w]).reshape(1, 2 * H)
    phase = jnp.concatenate(
        [jnp.zeros((H,), jnp.float32),
         jnp.full((H,), 0.5 * math.pi, jnp.float32)]).reshape(1, 2 * H)

    out_padded = pl.pallas_call(
        _sinusoidal_kernel,
        out_shape=jax.ShapeDtypeStruct((b_pad, f_pad), jnp.float32),
        grid=(b_pad // tb,),
        in_specs=[
            pl.BlockSpec((tb, 1), lambda i: (i, 0)),
            pl.BlockSpec((1, 2 * H), lambda i: (0, 0)),   # replicated
            pl.BlockSpec((1, 2 * H), lambda i: (0, 0)),   # replicated
        ],
        out_specs=pl.BlockSpec((tb, f_pad), lambda i: (i, 0)),
        compiler_params=pltpu.CompilerParams(
            dimension_semantics=("parallel",)),
    )(x2d, w_cat, phase)

    # Strip batch/lane padding and restore the PyTorch [x | sin | cos] order.
    # (Kernel layout is [sin | cos | x]; this is a tiny XLA slice+concat.
    #  In production, fold this column permutation into the consumer's first
    #  Linear layer weight instead.)
    valid = out_padded[:B, :out_dim]
    return jnp.concatenate([valid[:, 2 * H:2 * H + 1], valid[:, :2 * H]],
                           axis=-1)


if __name__ == "__main__":
    # Module config: dim must be even.
    dim = 32
    half_dim = dim // 2
    batch = 8

    key = jax.random.PRNGKey(0)
    k_x, k_w = jax.random.split(key)

    # Deterministic "learned" parameter (torch.randn equivalent).
    weights = jax.random.normal(k_w, (half_dim,), dtype=jnp.float32)
    # Example scalar timestep inputs, shape (B,).
    x = jax.random.normal(k_x, (batch,), dtype=jnp.float32)

    out = learned_sinusoidal_pos_emb(x, weights)
    out = jax.block_until_ready(out)

    # Reference check in plain JAX (exact PyTorch association of 2*pi).
    freqs_ref = x[:, None] * weights[None, :] * 2.0 * math.pi
    ref = jnp.concatenate(
        [x[:, None], jnp.sin(freqs_ref), jnp.cos(freqs_ref)], axis=-1)
    assert out.shape == (batch, dim + 1), out.shape
    # Slightly looser atol: kernel folds 2*pi into the weights and uses
    # cos(t) = sin(t + pi/2), both within a few ulps of the reference.
    assert jnp.allclose(out, ref, atol=1e-4, rtol=1e-5), "mismatch vs reference"

    print("KERNEL_OK")
</pallas_src>

<mosaic_0001>
module attributes {stable_mosaic.version = 11 : i64} {
  func.func @_sinusoidal_kernel(%arg0: i32, %arg1: memref<8x1xf32, #tpu.memory_space<vmem>>, %arg2: memref<1x32xf32, #tpu.memory_space<vmem>>, %arg3: memref<1x32xf32, #tpu.memory_space<vmem>>, %arg4: memref<8x128xf32, #tpu.memory_space<vmem>>) attributes {dimension_semantics = [#tpu.dimension_semantics<parallel>], iteration_bounds = array<i64: 1>, scalar_prefetch = 0 : i64, scratch_operands = 0 : i64, tpu.core_type = #tpu.core_type<tc>, window_params = [{transform_indices = @transform_0, window_bounds = array<i64: 8, 1>}, {pipeline_mode = #tpu.pipeline_mode<synchronous>, transform_indices = @transform_1, window_bounds = array<i64: 1, 32>}, {pipeline_mode = #tpu.pipeline_mode<synchronous>, transform_indices = @transform_2, window_bounds = array<i64: 1, 32>}, {transform_indices = @transform_3, window_bounds = array<i64: 8, 128>}]} {
    %c0 = arith.constant 0 : index
    %c0_0 = arith.constant 0 : index
    %0 = vector.load %arg1[%c0, %c0_0] : memref<8x1xf32, #tpu.memory_space<vmem>>, vector<8x1xf32>
    %c0_1 = arith.constant 0 : index
    %c0_2 = arith.constant 0 : index
    %1 = vector.load %arg2[%c0_1, %c0_2] : memref<1x32xf32, #tpu.memory_space<vmem>>, vector<1x32xf32>
    %c0_3 = arith.constant 0 : index
    %c0_4 = arith.constant 0 : index
    %2 = vector.load %arg3[%c0_3, %c0_4] : memref<1x32xf32, #tpu.memory_space<vmem>>, vector<1x32xf32>
    %3 = vector.broadcast %0 : vector<8x1xf32> to vector<8x32xf32>
    %4 = vector.broadcast %1 : vector<1x32xf32> to vector<8x32xf32>
    %5 = arith.mulf %3, %4 : vector<8x32xf32>
    %6 = vector.broadcast %2 : vector<1x32xf32> to vector<8x32xf32>
    %7 = arith.addf %5, %6 : vector<8x32xf32>
    %8 = math.sin %7 : vector<8x32xf32>
    %c0_5 = arith.constant 0 : index
    %c0_6 = arith.constant 0 : index
    %9 = vector.load %arg4[%c0_5, %c0_6] : memref<8x128xf32, #tpu.memory_space<vmem>>, vector<8x32xf32>
    tpu.vector_store %arg4[%c0_5, %c0_6], %8 {strides = array<i32>} : memref<8x128xf32, #tpu.memory_space<vmem>>, vector<8x32xf32>,
    %c0_7 = arith.constant 0 : index
    %c32 = arith.constant 32 : index
    %10 = vector.load %arg4[%c0_7, %c32] : memref<8x128xf32, #tpu.memory_space<vmem>>, vector<8x1xf32>
    tpu.vector_store %arg4[%c0_7, %c32], %0 {strides = array<i32>} : memref<8x128xf32, #tpu.memory_space<vmem>>, vector<8x1xf32>,
    return
  }
  func.func @transform_0(%arg0: i32) -> (i32, i32) {
    %c0_i32 = arith.constant 0 : i32
    %c0_i32_0 = arith.constant 0 : i32
    return %arg0, %c0_i32 : i32, i32
  }
  func.func @transform_1(%arg0: i32) -> (i32, i32) {
    %c0_i32 = arith.constant 0 : i32
    %c0_i32_0 = arith.constant 0 : i32
    %c0_i32_1 = arith.constant 0 : i32
    return %c0_i32, %c0_i32_0 : i32, i32
  }
  func.func @transform_2(%arg0: i32) -> (i32, i32) {
    %c0_i32 = arith.constant 0 : i32
    %c0_i32_0 = arith.constant 0 : i32
    %c0_i32_1 = arith.constant 0 : i32
    return %c0_i32, %c0_i32_0 : i32, i32
  }
  func.func @transform_3(%arg0: i32) -> (i32, i32) {
    %c0_i32 = arith.constant 0 : i32
    %c0_i32_0 = arith.constant 0 : i32
    return %arg0, %c0_i32 : i32, i32
  }
}

</mosaic_0001>

<llo_original>
// kernel: tpu_custom_call.1
$region0: #{tpu_custom_call.1}
  #allocation0 [shape = 'u32[]', space=smem, size = 0x4, offset = 0x4, fixed_abs, tag = 'smem constant byte address 0x4 - core index']
  #allocation1 [shape = 'u32[144,128]{1,0:T(1,128)}', space=vmem, size = 0x12000, scoped, tag = 'internal scratch']
  %s0 = inlined_call_operand.vmem [shape: f32[8,1], index: 0, kind: input, shape index: {}]
  %s1 = inlined_call_operand.vmem [shape: f32[1,32], index: 1, kind: input, shape index: {}]
  %s2 = inlined_call_operand.vmem [shape: f32[1,32], index: 2, kind: input, shape index: {}]
  %s3 = inlined_call_operand.hbm [shape: f32[8,128], index: 3, kind: output, shape index: {}]
  %s4 = sld [smem:[#allocation0]]
  $region22: #{tpu_custom_call.1} parent=0
    _
  %s6 = ssub.s32 1, %s4
  %s7 = scalar_select 0, %s6, %s4
  $region1: #{tpu_custom_call.1} parent=0
    #allocation2 [shape = 'u8[4096]{0}', space=vmem, size = 0x1000, scoped, tag = 'output window, operand 0, single buffered']
    #allocation3 [shape = 's32[1]{0}', space=sflag, size = 0x4, scoped, tag = 'scoped memory for tpu_custom_call.1']
    %8 = vsyncpa [#allocation3], 0
    // Predicated region
    $region2: #{tpu_custom_call.1} parent=1 // pred_check
      _
    $region3: #{tpu_custom_call.1} parent=1 // pred_check_branch
      %10 = sbr.rel (0) target = $region5
    $region4: #{tpu_custom_call.1} parent=1 // pred_region
      _
    $region5: #{tpu_custom_call.1} parent=1 // pred_fallthru
      _
    // Predicated region
    $region6: #{tpu_custom_call.1} parent=1 // pred_check
      _
    $region7: #{tpu_custom_call.1} parent=1 // pred_check_branch
      %12 = sbr.rel (0) target = $region9
    $region8: #{tpu_custom_call.1} parent=1 // pred_region
      _
    $region9: #{tpu_custom_call.1} parent=1 // pred_fallthru
      _
    // Predicated region
    $region10: #{tpu_custom_call.1} parent=1 // pred_check
      _
    $region11: #{tpu_custom_call.1} parent=1 // pred_check_branch
      %14 = sbr.rel (0) target = $region13
    $region12: #{tpu_custom_call.1} parent=1 // pred_region
      _
    $region13: #{tpu_custom_call.1} parent=1 // pred_fallthru
      _
    %v15 = vld [vmem:[%s0] sm:$0xff]
    %v16 = vld [vmem:[%s1] sm:$0x1]
    %v17 = vld [vmem:[%s2] sm:$0x1]
    %19 = vset.pattern.permute.xlu0 0
    %20 = vperm.xlu0 %19, %v15
    %v21 = vpop.permute.xlu0 %20
    %v24 = vlaneseq
    %v25 = vshrl.u32 %v24, 7
    %v26 = vsub.s32 0, %v25
    %v27 = vrot.slane %v16, %v26
    %v29 = vmul.f32 %v21, %v27
    %v31 = vlaneseq
    %v32 = vshrl.u32 %v31, 7
    %v33 = vsub.s32 0, %v32
    %v34 = vrot.slane %v17, %v33
    %v36 = vadd.f32 %v29, %v34
    %v37 = vand.u32 2147483647, %v36
    %vm38 = vcmp.le.f32.partialorder %v37, 0.7853982
    %vm39 = vcmp.lt.s32.totalorder %v36, 0
    %v40 = vand.u32 %v36, 2139095040
    %v41 = vshrl.u32 %v40, 23
    %v42 = vsub.s32 %v41, 127
    %v43 = vand.u32 2147483647, %v36
    %v44 = vand.u32 %v43, 8388607
    %v45 = vor.u32 %v44, 8388608
    %v46 = vsub.s32 0, %v45
    %v47 = vadd.s32 %v42, 1
    %vm48 = vcmp.gt.s32.totalorder %v47, 0
    %v49 = vsel %vm48, %v47, 0
    %v50 = vshrl.u32 %v49, 5
    %v51 = vand.u32 %v49, 31
    %v52 = vsub.s32 32, %v51
    %v53 = vshrl.u32 683565275, %v52
    %v54 = vshll.u32 683565275, %v51
    %v55 = vshrl.u32 2475754826, %v52
    %v56 = vor.u32 %v54, %v55
    %v57 = vshll.u32 2475754826, %v51
    %v58 = vshrl.u32 2131351028, %v52
    %v59 = vor.u32 %v57, %v58
    %v60 = vshll.u32 2131351028, %v51
    %v61 = vshrl.u32 2102212464, %v52
    %v62 = vor.u32 %v60, %v61
    %v63 = vshll.u32 2102212464, %v51
    %v64 = vshrl.u32 920167782, %v52
    %v65 = vor.u32 %v63, %v64
    %v66 = vshll.u32 920167782, %v51
    %v67 = vshrl.u32 1326507024, %v52
    %v68 = vor.u32 %v66, %v67
    %vm69 = vcmp.lt.s32.totalorder %v50, 1
    %vm70 = vcmp.lt.s32.totalorder %v50, 2
    %vm71 = vcmp.lt.s32.totalorder %v50, 3
    %vm72 = vcmp.lt.s32.totalorder %v50, 4
    %v73 = vsel %vm69, %v53, %v56
    %v74 = vsel %vm72, %v62, 2102212464
    %v75 = vsel %vm71, %v59, %v74
    %v76 = vsel %vm70, %v73, %v75
    %v77 = vsel %vm69, %v56, %v59
    %v78 = vsel %vm72, %v65, 920167782
    %v79 = vsel %vm71, %v62, %v78
    %v80 = vsel %vm70, %v77, %v79
    %v81 = vsel %vm69, %v59, %v62
    %v82 = vsel %vm72, %v68, 1326507024
    %v83 = vsel %vm71, %v65, %v82
    %v84 = vsel %vm70, %v81, %v83
    %v85 = vshll.u32 %v45, 8
    %v86 = vmul.u32.u64.compose %v85, %v84
    %v87 = vextract.low.u32 %v86
    %v88 = vextract.high.u32 %v86
    %v89 = vmul.u32.u64.compose %v85, %v80
    %v90 = vextract.low.u32 %v89
    %v91 = vextract.high.u32 %v89
    %v92 = vmul.u32 %v85, %v76
    %v93 = vadd.s32 %v88, %v90
    %vm94 = vc.u32 %v88, %v90
    %v95 = vadd.s32 %v91, 1
    %v96 = vsel %vm94, %v95, %v91
    %v97 = vadd.s32 %v92, %v96
    %v98 = vadd.s32 %v97, 536870912
    %v99 = vshrl.u32 %v98, 30
    %v100 = vshll.u32 %v99, 30
    %v101 = vsub.s32 %v97, %v100
    %vm102 = vcmp.lt.s32.totalorder %v101, 0
    %v103 = vsub.s32 0, %v101
    %v104 = vsel %vm102, %v103, %v101
    %v105 = vclz %v104
    %v106 = vsub.s32 %v105, 2
    %vm107 = vcmp.gt.s32.totalorder 0, %v106
    %v108 = vsel %vm107, 0, %v106
    %v109 = vsub.s32 32, %v108
    %v110 = vshll.u32 %v101, %v108
    %v111 = vshrl.u32 %v93, %v109
    %v112 = vor.u32 %v110, %v111
    %v113 = vsub.s32 4294967266, %v108
    %v114 = vadd.s32 %v113, 127
    %v115 = vshll.u32 %v114, 23
    %v116 = vor.u32 4788187, %v115
    %v117 = vand.u32 2147483647, %v116
    %v119 = vcvt.s32.f32 %v112
    %v120 = vmul.f32 %v119, %v117
    %v121 = vxor.u32 %v120, 2147483648
    %v122 = vsel %vm39, %v121, %v120
    %v123 = vsub.s32 4, %v99
    %v124 = vsel %vm39, %v123, %v99
    %v125 = vsel %vm38, %v36, %v122
    %v126 = vsel %vm38, 0, %v124
    %v127 = vcosq.f32.pop %v125
    %v128 = vsinq.f32.pop %v125
    %vm129 = vweird.f32 %v36
    %v130 = vadd.s32 %v126, 3
    %v131 = vand.u32 %v130, 3
    %vm132 = vcmp.lt.s32.totalorder %v131, 2
    %vm133 = vcmp.eq.s32.totalorder %v131, 0
    %v134 = vxor.u32 %v128, 2147483648
    %v135 = vsel %vm133, %v127, %v134
    %vm136 = vcmp.eq.s32.totalorder %v131, 2
    %v137 = vxor.u32 %v127, 2147483648
    %v138 = vsel %vm136, %v137, %v128
    %v139 = vsel %vm132, %v135, %v138
    %v140 = vsel %vm129, nan, %v139
    %vm141 = vcmask 261120
    %142 = vst.msk [vmem:[#allocation2] sm:$0xff] %vm141, %v140
    %143 = vrot.lane.b32.xlu0 %v15, 32
    %v144 = vpop.permute.xlu0 %143
    %vm146 = vcmask 269568
    %147 = vst.msk [vmem:[#allocation2] sm:$0xff] %vm146, %v144
    // Predicated region
    $region14: #{tpu_custom_call.1} parent=1 // pred_check
      _
    $region15: #{tpu_custom_call.1} parent=1 // pred_check_branch
      %149 = sbr.rel (0) target = $region17
    $region16: #{tpu_custom_call.1} parent=1 // pred_region
      %s151 = ssub.s32 128, 128
      %152 = vsyncadd [#allocation3], %s151
      %s154 = sshll.u32 [#allocation2], 4
      %s155 = int_to_ptr.vmem [resolvable:$true] %s154
      %157 = dma.vmem_to_hbm [thread:$0]  %s155, 128, %s3, [#allocation3]
    $region17: #{tpu_custom_call.1} parent=1 // pred_fallthru
      _
    // Predicated region
    $region18: #{tpu_custom_call.1} parent=1 // pred_check
      _
    $region19: #{tpu_custom_call.1} parent=1 // pred_check_branch
      %159 = sbr.rel (0) target = $region21
    $region20: #{tpu_custom_call.1} parent=1 // pred_region
      %160 = dma.done [#allocation3], 128
    $region21: #{tpu_custom_call.1} parent=1 // pred_fallthru
      _
    %161 = vsyncpa [#allocation3], 1

</llo_original>
